<compile_context>
chip_gen: v7x
topology: tpu7x:2x2x1
jax: 0.10.0
libtpu: 0.0.40
codegen_flags: <defaults>
</compile_context>

<pallas_src>
import jax
import jax.numpy as jnp
from jax.experimental import pallas as pl
from jax.experimental.pallas import tpu as pltpu


def _round_up(x, m):
    return (x + m - 1) // m * m


def prelu_kernel(x_ref, w_ref, o_ref):
    # x_ref/o_ref: (R, L) VMEM tile; w_ref: (R, 1) per-row weight (lane broadcast).
    x = x_ref[...]
    w = w_ref[...]
    # PReLU: where(x > 0, x, w * x). Explicit cast keeps bf16 inputs safe.
    o_ref[...] = jnp.where(x > 0, x, w * x).astype(o_ref.dtype)


def prelu_pallas(x, weights, *, donate_x=False):
    N, C, H, W = x.shape
    assert weights.shape == (C,)
    rows, cols = N * C, H * W
    itemsize = jnp.dtype(x.dtype).itemsize
    # Sublane packing: 8 rows for 4-byte dtypes, 16 for 2-byte, 32 for 1-byte.
    sublane = max(8, 32 // itemsize)

    # Lane-dense flattened view + per-row weight column (weight cast to x dtype).
    x2 = x.reshape(rows, cols)
    w_col = jnp.broadcast_to(weights[None, :], (N, C)).reshape(rows, 1).astype(x.dtype)

    # Block sizing: last dim a multiple of 128 (up to 2048 lanes), rows a multiple
    # of the sublane packing, targeting ~4 MiB per block.  With double-buffered
    # input + output that is ~16 MiB in flight; vmem_limit_bytes=32 MiB below
    # keeps this safe on v5e/v6e/v7x alike.
    L_blk = min(_round_up(cols, 128), 2048)
    target_block_bytes = 4 * 1024 * 1024
    r_cap = max(sublane, (target_block_bytes // (L_blk * itemsize)) // sublane * sublane)
    R_blk = min(_round_up(rows, sublane), r_cap)

    # v7x has 2 TensorCores: if the whole problem fits in one block but there is
    # more than one sublane-group of rows, split rows so the parallel grid has
    # at least 2 programs.
    if pl.cdiv(rows, R_blk) == 1 and pl.cdiv(cols, L_blk) == 1 and rows > sublane:
        R_blk = _round_up(pl.cdiv(rows, 2), sublane)

    grid = (pl.cdiv(rows, R_blk), pl.cdiv(cols, L_blk))

    out = pl.pallas_call(
        prelu_kernel,
        out_shape=jax.ShapeDtypeStruct((rows, cols), x.dtype),
        grid=grid,
        in_specs=[
            pl.BlockSpec((R_blk, L_blk), lambda i, j: (i, j)),
            pl.BlockSpec((R_blk, 1), lambda i, j: (i, 0)),
        ],
        out_specs=pl.BlockSpec((R_blk, L_blk), lambda i, j: (i, j)),
        compiler_params=pltpu.CompilerParams(
            dimension_semantics=("parallel", "parallel"),
            vmem_limit_bytes=32 * 1024 * 1024,
        ),
        cost_estimate=pl.CostEstimate(
            flops=2 * rows * cols,
            transcendentals=0,
            bytes_accessed=2 * rows * cols * itemsize + rows * itemsize,
        ),
        input_output_aliases=({0: 0} if donate_x else {}),
    )(x2, w_col)

    return out.reshape(N, C, H, W)


if __name__ == "__main__":
    num_params = 3  # matches FPReLU(num_params=3)
    key = jax.random.PRNGKey(0)
    kx, kw = jax.random.split(key)

    # PReLU with num_params=3 requires channel dim (dim 1) == 3.
    x = jax.random.normal(kx, (2, num_params, 16, 16), dtype=jnp.float32)
    # The torch module draws torch.rand(num_params) each forward; here we make
    # the weights deterministic in-script (uniform [0, 1), same distribution).
    weights = jax.random.uniform(kw, (num_params,), dtype=jnp.float32)

    out = prelu_pallas(x, weights)
    out = jax.block_until_ready(out)

    # Pure-JAX reference for correctness.
    ref = jnp.where(x > 0, x, weights[None, :, None, None] * x)
    assert out.shape == x.shape and out.dtype == x.dtype
    assert jnp.allclose(out, ref, atol=1e-6, rtol=1e-6)

    print("KERNEL_OK")
</pallas_src>

<mosaic_0001>
module attributes {stable_mosaic.version = 11 : i64} {
  func.func @prelu_kernel(%arg0: i32, %arg1: i32, %arg2: memref<8x256xf32, #tpu.memory_space<vmem>>, %arg3: memref<8x1xf32, #tpu.memory_space<vmem>>, %arg4: memref<8x256xf32, #tpu.memory_space<vmem>>) attributes {dimension_semantics = [#tpu.dimension_semantics<parallel>, #tpu.dimension_semantics<parallel>], iteration_bounds = array<i64: 1, 1>, scalar_prefetch = 0 : i64, scratch_operands = 0 : i64, tpu.core_type = #tpu.core_type<tc>, window_params = [{transform_indices = @transform_0, window_bounds = array<i64: 8, 256>}, {transform_indices = @transform_1, window_bounds = array<i64: 8, 1>}, {transform_indices = @transform_2, window_bounds = array<i64: 8, 256>}]} {
    %c0 = arith.constant 0 : index
    %c0_0 = arith.constant 0 : index
    %0 = vector.load %arg2[%c0, %c0_0] : memref<8x256xf32, #tpu.memory_space<vmem>>, vector<8x256xf32>
    %c0_1 = arith.constant 0 : index
    %c0_2 = arith.constant 0 : index
    %1 = vector.load %arg3[%c0_1, %c0_2] : memref<8x1xf32, #tpu.memory_space<vmem>>, vector<8x1xf32>
    %cst = arith.constant 0.000000e+00 : f32
    %2 = vector.broadcast %cst : f32 to vector<8x256xf32>
    %3 = arith.cmpf ogt, %0, %2 : vector<8x256xf32>
    %4 = vector.broadcast %1 : vector<8x1xf32> to vector<8x256xf32>
    %5 = arith.mulf %4, %0 : vector<8x256xf32>
    %6 = arith.select %3, %0, %5 : vector<8x256xi1>, vector<8x256xf32>
    %c0_3 = arith.constant 0 : index
    %c0_4 = arith.constant 0 : index
    %7 = vector.load %arg4[%c0_3, %c0_4] : memref<8x256xf32, #tpu.memory_space<vmem>>, vector<8x256xf32>
    tpu.vector_store %arg4[%c0_3, %c0_4], %6 {strides = array<i32>} : memref<8x256xf32, #tpu.memory_space<vmem>>, vector<8x256xf32>,
    return
  }
  func.func @transform_0(%arg0: i32, %arg1: i32) -> (i32, i32) {
    %c0_i32 = arith.constant 0 : i32
    return %arg0, %arg1 : i32, i32
  }
  func.func @transform_1(%arg0: i32, %arg1: i32) -> (i32, i32) {
    %c0_i32 = arith.constant 0 : i32
    %c0_i32_0 = arith.constant 0 : i32
    return %arg0, %c0_i32 : i32, i32
  }
  func.func @transform_2(%arg0: i32, %arg1: i32) -> (i32, i32) {
    %c0_i32 = arith.constant 0 : i32
    return %arg0, %arg1 : i32, i32
  }
}

</mosaic_0001>

<llo_original>
// kernel: tpu_custom_call.1
$region0: #{tpu_custom_call.1}
  #allocation0 [shape = 'u32[]', space=smem, size = 0x4, offset = 0x4, fixed_abs, tag = 'smem constant byte address 0x4 - core index']
  #allocation1 [shape = 'u32[144,128]{1,0:T(1,128)}', space=vmem, size = 0x12000, scoped, tag = 'internal scratch']
  %s0 = inlined_call_operand.hbm [shape: f32[6,256], index: 0, kind: input, shape index: {}]
  %s1 = inlined_call_operand.vmem [shape: f32[6,1], index: 1, kind: input, shape index: {}]
  %s2 = inlined_call_operand.hbm [shape: f32[6,256], index: 2, kind: output, shape index: {}]
  %s3 = sld [smem:[#allocation0]]
  $region22: #{tpu_custom_call.1} parent=0
    _
  %s5 = ssub.s32 1, %s3
  %s6 = scalar_select 0, %s5, %s3
  $region1: #{tpu_custom_call.1} parent=0
    #allocation2 [shape = 'u8[8192]{0}', space=vmem, size = 0x2000, scoped, tag = 'input window, operand 0, single buffered']
    #allocation3 [shape = 's32[1]{0}', space=sflag, size = 0x4, scoped, tag = 'scoped memory for tpu_custom_call.1']
    #allocation4 [shape = 's32[1]{0}', space=sflag, size = 0x4, scoped, tag = 'scoped memory for tpu_custom_call.1']
    #allocation5 [shape = 'u8[8192]{0}', space=vmem, size = 0x2000, scoped, tag = 'output window, operand 0, single buffered']
    %7 = vsyncpa [#allocation3], 0
    %8 = vsyncpa [#allocation4], 0
    // Predicated region
    $region2: #{tpu_custom_call.1} parent=1 // pred_check
      _
    $region3: #{tpu_custom_call.1} parent=1 // pred_check_branch
      %10 = sbr.rel (0) target = $region5
    $region4: #{tpu_custom_call.1} parent=1 // pred_region
      %s12 = ssub.s32 256, 256
      %13 = vsyncadd [#allocation3], %s12
      %s15 = sshll.u32 [#allocation2], 4
      %s16 = int_to_ptr.vmem [resolvable:$true] %s15
      %18 = dma.hbm_to_vmem [thread:$0]  %s0, 256, %s16, [#allocation3]
    $region5: #{tpu_custom_call.1} parent=1 // pred_fallthru
      _
    // Predicated region
    $region6: #{tpu_custom_call.1} parent=1 // pred_check
      _
    $region7: #{tpu_custom_call.1} parent=1 // pred_check_branch
      %20 = sbr.rel (0) target = $region9
    $region8: #{tpu_custom_call.1} parent=1 // pred_region
      _
    $region9: #{tpu_custom_call.1} parent=1 // pred_fallthru
      _
    // Predicated region
    $region10: #{tpu_custom_call.1} parent=1 // pred_check
      _
    $region11: #{tpu_custom_call.1} parent=1 // pred_check_branch
      %22 = sbr.rel (0) target = $region13
    $region12: #{tpu_custom_call.1} parent=1 // pred_region
      %23 = dma.done [#allocation3], 256
    $region13: #{tpu_custom_call.1} parent=1 // pred_fallthru
      _
    %v24 = vld [vmem:[#allocation2] sm:$0xff]
    %v25 = vld [vmem:[#allocation2 + $0x8] sm:$0xff]
    %v26 = vld [vmem:[%s1] sm:$0xff]
    %vm27 = vcmp.gt.f32.partialorder %v24, 0.0
    %vm28 = vcmp.gt.f32.partialorder %v25, 0.0
    %30 = vset.pattern.permute.xlu0 0
    %31 = vperm.xlu0 %30, %v26
    %v32 = vpop.permute.xlu0 %31
    %v34 = vmul.f32 %v32, %v24
    %v35 = vmul.f32 %v32, %v25
    %v36 = vsel %vm27, %v24, %v34
    %v37 = vsel %vm28, %v25, %v35
    %38 = vst [vmem:[#allocation5] sm:$0xff] %v36
    %39 = vst [vmem:[#allocation5 + $0x8] sm:$0xff] %v37
    // Predicated region
    $region14: #{tpu_custom_call.1} parent=1 // pred_check
      _
    $region15: #{tpu_custom_call.1} parent=1 // pred_check_branch
      %41 = sbr.rel (0) target = $region17
    $region16: #{tpu_custom_call.1} parent=1 // pred_region
      %s43 = ssub.s32 256, 256
      %44 = vsyncadd [#allocation4], %s43
      %s46 = sshll.u32 [#allocation5], 4
      %s47 = int_to_ptr.vmem [resolvable:$true] %s46
      %49 = dma.vmem_to_hbm [thread:$0]  %s47, 256, %s2, [#allocation4]
    $region17: #{tpu_custom_call.1} parent=1 // pred_fallthru
      _
    // Predicated region
    $region18: #{tpu_custom_call.1} parent=1 // pred_check
      _
    $region19: #{tpu_custom_call.1} parent=1 // pred_check_branch
      %51 = sbr.rel (0) target = $region21
    $region20: #{tpu_custom_call.1} parent=1 // pred_region
      %52 = dma.done [#allocation4], 256
    $region21: #{tpu_custom_call.1} parent=1 // pred_fallthru
      _
    %53 = vsyncpa [#allocation3], 1
    %54 = vsyncpa [#allocation4], 1

</llo_original>
